<compile_context>
chip_gen: v7x
topology: tpu7x:2x2x1
jax: 0.10.0
libtpu: 0.0.40
codegen_flags: <defaults>
</compile_context>

<pallas_src>
import functools
import math

import jax
import jax.numpy as jnp
from jax.experimental import pallas as pl
from jax.experimental.pallas import tpu as pltpu


HIDDEN = 64
HIDDEN_PAD = 128   # lane-dense intermediates (extra MXU columns are free)


def _round_up(x, m):
    return ((x + m - 1) // m) * m


def actor_forward_kernel(
    s_ref, eps_ref,
    w1_ref, b1_ref, w2_ref, b2_ref, w3_ref, b3_ref,
    a_ref,
    *, std,
):
    # ---- MLP: Linear+ReLU, Linear+ReLU, Linear+Softplus (all f32) ---------
    x = s_ref[...]                                                      # [TB, S]
    h1 = jnp.dot(x, w1_ref[...], preferred_element_type=jnp.float32) + b1_ref[...]
    h1 = jnp.maximum(h1, 0.0)                                           # [TB, 128]

    h2 = jnp.dot(h1, w2_ref[...], preferred_element_type=jnp.float32) + b2_ref[...]
    h2 = jnp.maximum(h2, 0.0)                                           # [TB, 128]

    h3 = jnp.dot(h2, w3_ref[...], preferred_element_type=jnp.float32) + b3_ref[...]
    # Numerically-stable softplus (torch.nn.Softplus, beta=1).
    mu = jnp.maximum(h3, 0.0) + jnp.log1p(jnp.exp(-jnp.abs(h3)))        # [TB, A]

    # ---- Reparameterized sample of Normal(mu, std) -------------------------
    a_ref[...] = mu + std * eps_ref[...]


def _pick_tile(batch, max_tb):
    """Batch-tile size: 8-row sublane granule, amortize per-step overhead,
    and ensure >=2 grid steps for big batches so v7x's 2 TCs both run."""
    rows = _round_up(batch, 8)
    if rows > max_tb:
        return max_tb
    if rows >= 1024:                       # big enough to split across 2 TCs
        return _round_up(pl.cdiv(rows, 2), 8)
    return rows


def actor_forward(s, eps, params, std, *, max_tb=1024):
    """s: [B, state_dim] f32, eps: [B, action_dim] f32 standard-normal noise.

    Returns (a, log_prob), each [B, action_dim] f32.
    """
    w1, b1, w2, b2, w3, b3 = params            # [in, out] / [1, out], f32
    B, S = s.shape
    A = w3.shape[1]

    # Zero-pad the hidden width to 128 so h1/h2 are lane-dense f32 tiles.
    # Padded lanes carry exact zeros (zero weight cols + zero bias + ReLU),
    # so the math is unchanged.
    w1p = jnp.pad(w1, ((0, 0), (0, HIDDEN_PAD - HIDDEN)))               # [S, 128]
    b1p = jnp.pad(b1, ((0, 0), (0, HIDDEN_PAD - HIDDEN)))               # [1, 128]
    w2p = jnp.pad(w2, ((0, HIDDEN_PAD - HIDDEN), (0, HIDDEN_PAD - HIDDEN)))
    b2p = jnp.pad(b2, ((0, 0), (0, HIDDEN_PAD - HIDDEN)))               # [1, 128]
    w3p = jnp.pad(w3, ((0, HIDDEN_PAD - HIDDEN), (0, 0)))               # [128, A]

    TB = _pick_tile(B, max_tb)
    grid = (pl.cdiv(B, TB),)                   # ragged last block is masked

    kernel = functools.partial(actor_forward_kernel, std=float(std))

    row_spec = lambda i: (i, 0)                # batch-tiled arrays
    const_spec = lambda i: (0, 0)              # weights/biases: VMEM-resident

    a = pl.pallas_call(
        kernel,
        out_shape=jax.ShapeDtypeStruct((B, A), jnp.float32),
        grid=grid,
        in_specs=[
            pl.BlockSpec((TB, S), row_spec),          # s
            pl.BlockSpec((TB, A), row_spec),          # eps
            pl.BlockSpec(w1p.shape, const_spec),      # w1 (hidden-padded)
            pl.BlockSpec(b1p.shape, const_spec),      # b1
            pl.BlockSpec(w2p.shape, const_spec),      # w2
            pl.BlockSpec(b2p.shape, const_spec),      # b2
            pl.BlockSpec(w3p.shape, const_spec),      # w3
            pl.BlockSpec(b3.shape, const_spec),       # b3
        ],
        out_specs=pl.BlockSpec((TB, A), row_spec),    # a
        compiler_params=pltpu.CompilerParams(
            dimension_semantics=("parallel",),        # 2-TC sharding on v7x
        ),
    )(s, eps, w1p, b1p, w2p, b2p, w3p, b3)

    # log_prob depends only on eps and constants -> fused XLA elementwise op,
    # no extra kernel output stream.
    logp_const = -(math.log(float(std)) + 0.5 * math.log(2.0 * math.pi))
    log_prob = logp_const - 0.5 * (eps * eps)

    return a, log_prob


def init_params(key, state_dim, action_dim):
    """Deterministic synthetic weights (shapes from the nn.Linear layers)."""
    ks = jax.random.split(key, 6)

    def linear(kw, kb, fan_in, fan_out):
        bound = 1.0 / math.sqrt(fan_in)
        # Stored as [in, out] (pre-transposed vs. PyTorch's [out, in]).
        w = jax.random.uniform(kw, (fan_in, fan_out), jnp.float32, -bound, bound)
        b = jax.random.uniform(kb, (1, fan_out), jnp.float32, -bound, bound)
        return w, b

    w1, b1 = linear(ks[0], ks[1], state_dim, HIDDEN)
    w2, b2 = linear(ks[2], ks[3], HIDDEN, HIDDEN)
    w3, b3 = linear(ks[4], ks[5], HIDDEN, action_dim)
    return (w1, b1, w2, b2, w3, b3)


if __name__ == "__main__":
    BATCH, STATE_DIM, ACTION_DIM = 8, 32, 8
    STD_INIT = 0.5

    key = jax.random.PRNGKey(0)
    k_param, k_state, k_noise = jax.random.split(key, 3)

    params = init_params(k_param, STATE_DIM, ACTION_DIM)
    s = jax.random.normal(k_state, (BATCH, STATE_DIM), dtype=jnp.float32)
    eps = jax.random.normal(k_noise, (BATCH, ACTION_DIM), dtype=jnp.float32)

    a, log_prob = actor_forward(s, eps, params, STD_INIT)
    jax.block_until_ready((a, log_prob))

    # Reference in plain JAX (same math, unpadded weights).
    w1, b1, w2, b2, w3, b3 = params
    h = jnp.maximum(s @ w1 + b1, 0.0)
    h = jnp.maximum(h @ w2 + b2, 0.0)
    mu = jax.nn.softplus(h @ w3 + b3)
    a_ref = mu + STD_INIT * eps
    lp_ref = (-((a_ref - mu) ** 2) / (2 * STD_INIT ** 2)
              - jnp.log(STD_INIT) - 0.5 * math.log(2 * math.pi))

    assert a.shape == (BATCH, ACTION_DIM) and log_prob.shape == (BATCH, ACTION_DIM)
    assert jnp.allclose(a, a_ref, atol=1e-4), "action mismatch"
    assert jnp.allclose(log_prob, lp_ref, atol=1e-4), "log_prob mismatch"

    # Larger-batch smoke test (exercises multi-step grid / ragged last block).
    B2 = 1030
    s2 = jax.random.normal(jax.random.PRNGKey(1), (B2, STATE_DIM), dtype=jnp.float32)
    eps2 = jax.random.normal(jax.random.PRNGKey(2), (B2, ACTION_DIM), dtype=jnp.float32)
    a2, lp2 = actor_forward(s2, eps2, params, STD_INIT)
    jax.block_until_ready((a2, lp2))
    h = jnp.maximum(s2 @ w1 + b1, 0.0)
    h = jnp.maximum(h @ w2 + b2, 0.0)
    mu2 = jax.nn.softplus(h @ w3 + b3)
    assert jnp.allclose(a2, mu2 + STD_INIT * eps2, atol=1e-4), "large-batch mismatch"

    # TODO(synk): eps could be generated on-chip (pltpu.prng_*) to drop its HBM
    # read stream, but that changes RNG provenance vs. host-generated noise.

    print("KERNEL_OK")
</pallas_src>

<mosaic_0001>
module attributes {stable_mosaic.version = 11 : i64} {
  func.func @actor_forward_kernel(%arg0: i32, %arg1: memref<8x32xf32, #tpu.memory_space<vmem>>, %arg2: memref<8x8xf32, #tpu.memory_space<vmem>>, %arg3: memref<32x128xf32, #tpu.memory_space<vmem>>, %arg4: memref<1x128xf32, #tpu.memory_space<vmem>>, %arg5: memref<128x128xf32, #tpu.memory_space<vmem>>, %arg6: memref<1x128xf32, #tpu.memory_space<vmem>>, %arg7: memref<128x8xf32, #tpu.memory_space<vmem>>, %arg8: memref<1x8xf32, #tpu.memory_space<vmem>>, %arg9: memref<8x8xf32, #tpu.memory_space<vmem>>) attributes {dimension_semantics = [#tpu.dimension_semantics<parallel>], iteration_bounds = array<i64: 1>, scalar_prefetch = 0 : i64, scratch_operands = 0 : i64, tpu.core_type = #tpu.core_type<tc>, window_params = [{transform_indices = @transform_0, window_bounds = array<i64: 8, 32>}, {transform_indices = @transform_1, window_bounds = array<i64: 8, 8>}, {pipeline_mode = #tpu.pipeline_mode<synchronous>, transform_indices = @transform_2, window_bounds = array<i64: 32, 128>}, {pipeline_mode = #tpu.pipeline_mode<synchronous>, transform_indices = @transform_3, window_bounds = array<i64: 1, 128>}, {pipeline_mode = #tpu.pipeline_mode<synchronous>, transform_indices = @transform_4, window_bounds = array<i64: 128, 128>}, {pipeline_mode = #tpu.pipeline_mode<synchronous>, transform_indices = @transform_5, window_bounds = array<i64: 1, 128>}, {pipeline_mode = #tpu.pipeline_mode<synchronous>, transform_indices = @transform_6, window_bounds = array<i64: 128, 8>}, {pipeline_mode = #tpu.pipeline_mode<synchronous>, transform_indices = @transform_7, window_bounds = array<i64: 1, 8>}, {transform_indices = @transform_8, window_bounds = array<i64: 8, 8>}]} {
    %c0 = arith.constant 0 : index
    %c0_0 = arith.constant 0 : index
    %0 = vector.load %arg1[%c0, %c0_0] : memref<8x32xf32, #tpu.memory_space<vmem>>, vector<8x32xf32>
    %c0_1 = arith.constant 0 : index
    %c0_2 = arith.constant 0 : index
    %1 = vector.load %arg3[%c0_1, %c0_2] : memref<32x128xf32, #tpu.memory_space<vmem>>, vector<32x128xf32>
    %cst = arith.constant dense<0.000000e+00> : vector<8x128xf32>
    %2 = tpu.matmul %0, %1, %cst {dimension_numbers = #tpu.dot_dimension_numbers<[1], [0], [0], [1], [0, 0, 1, 1], [], []>} : vector<8x32xf32>, vector<32x128xf32>, vector<8x128xf32> -> vector<8x128xf32>
    %c0_3 = arith.constant 0 : index
    %c0_4 = arith.constant 0 : index
    %3 = vector.load %arg4[%c0_3, %c0_4] : memref<1x128xf32, #tpu.memory_space<vmem>>, vector<1x128xf32>
    %4 = vector.broadcast %3 : vector<1x128xf32> to vector<8x128xf32>
    %5 = arith.addf %2, %4 : vector<8x128xf32>
    %cst_5 = arith.constant 0.000000e+00 : f32
    %6 = vector.broadcast %cst_5 : f32 to vector<8x128xf32>
    %7 = arith.maximumf %5, %6 : vector<8x128xf32>
    %c0_6 = arith.constant 0 : index
    %c0_7 = arith.constant 0 : index
    %8 = vector.load %arg5[%c0_6, %c0_7] : memref<128x128xf32, #tpu.memory_space<vmem>>, vector<128x128xf32>
    %cst_8 = arith.constant dense<0.000000e+00> : vector<8x128xf32>
    %9 = tpu.matmul %7, %8, %cst_8 {dimension_numbers = #tpu.dot_dimension_numbers<[1], [0], [0], [1], [0, 0, 1, 1], [], []>} : vector<8x128xf32>, vector<128x128xf32>, vector<8x128xf32> -> vector<8x128xf32>
    %c0_9 = arith.constant 0 : index
    %c0_10 = arith.constant 0 : index
    %10 = vector.load %arg6[%c0_9, %c0_10] : memref<1x128xf32, #tpu.memory_space<vmem>>, vector<1x128xf32>
    %11 = vector.broadcast %10 : vector<1x128xf32> to vector<8x128xf32>
    %12 = arith.addf %9, %11 : vector<8x128xf32>
    %cst_11 = arith.constant 0.000000e+00 : f32
    %13 = vector.broadcast %cst_11 : f32 to vector<8x128xf32>
    %14 = arith.maximumf %12, %13 : vector<8x128xf32>
    %c0_12 = arith.constant 0 : index
    %c0_13 = arith.constant 0 : index
    %15 = vector.load %arg7[%c0_12, %c0_13] : memref<128x8xf32, #tpu.memory_space<vmem>>, vector<128x8xf32>
    %cst_14 = arith.constant dense<0.000000e+00> : vector<8x8xf32>
    %16 = tpu.matmul %14, %15, %cst_14 {dimension_numbers = #tpu.dot_dimension_numbers<[1], [0], [0], [1], [0, 0, 1, 1], [], []>} : vector<8x128xf32>, vector<128x8xf32>, vector<8x8xf32> -> vector<8x8xf32>
    %c0_15 = arith.constant 0 : index
    %c0_16 = arith.constant 0 : index
    %17 = vector.load %arg8[%c0_15, %c0_16] : memref<1x8xf32, #tpu.memory_space<vmem>>, vector<1x8xf32>
    %18 = vector.broadcast %17 : vector<1x8xf32> to vector<8x8xf32>
    %19 = arith.addf %16, %18 : vector<8x8xf32>
    %cst_17 = arith.constant 0.000000e+00 : f32
    %20 = vector.broadcast %cst_17 : f32 to vector<8x8xf32>
    %21 = arith.maximumf %19, %20 : vector<8x8xf32>
    %22 = math.absf %19 : vector<8x8xf32>
    %cst_18 = arith.constant 0.000000e+00 : f32
    %23 = vector.broadcast %cst_18 : f32 to vector<8x8xf32>
    %24 = arith.subf %23, %22 : vector<8x8xf32>
    %25 = math.exp %24 : vector<8x8xf32>
    %26 = math.log1p %25 : vector<8x8xf32>
    %27 = arith.addf %21, %26 : vector<8x8xf32>
    %c0_19 = arith.constant 0 : index
    %c0_20 = arith.constant 0 : index
    %28 = vector.load %arg2[%c0_19, %c0_20] : memref<8x8xf32, #tpu.memory_space<vmem>>, vector<8x8xf32>
    %cst_21 = arith.constant 5.000000e-01 : f32
    %29 = vector.broadcast %cst_21 : f32 to vector<8x8xf32>
    %30 = arith.mulf %29, %28 : vector<8x8xf32>
    %31 = arith.addf %27, %30 : vector<8x8xf32>
    %c0_22 = arith.constant 0 : index
    %c0_23 = arith.constant 0 : index
    %32 = vector.load %arg9[%c0_22, %c0_23] : memref<8x8xf32, #tpu.memory_space<vmem>>, vector<8x8xf32>
    tpu.vector_store %arg9[%c0_22, %c0_23], %31 {strides = array<i32>} : memref<8x8xf32, #tpu.memory_space<vmem>>, vector<8x8xf32>,
    return
  }
  func.func @transform_0(%arg0: i32) -> (i32, i32) {
    %c0_i32 = arith.constant 0 : i32
    %c0_i32_0 = arith.constant 0 : i32
    return %arg0, %c0_i32 : i32, i32
  }
  func.func @transform_1(%arg0: i32) -> (i32, i32) {
    %c0_i32 = arith.constant 0 : i32
    %c0_i32_0 = arith.constant 0 : i32
    return %arg0, %c0_i32 : i32, i32
  }
  func.func @transform_2(%arg0: i32) -> (i32, i32) {
    %c0_i32 = arith.constant 0 : i32
    %c0_i32_0 = arith.constant 0 : i32
    %c0_i32_1 = arith.constant 0 : i32
    return %c0_i32, %c0_i32_0 : i32, i32
  }
  func.func @transform_3(%arg0: i32) -> (i32, i32) {
    %c0_i32 = arith.constant 0 : i32
    %c0_i32_0 = arith.constant 0 : i32
    %c0_i32_1 = arith.constant 0 : i32
    return %c0_i32, %c0_i32_0 : i32, i32
  }
  func.func @transform_4(%arg0: i32) -> (i32, i32) {
    %c0_i32 = arith.constant 0 : i32
    %c0_i32_0 = arith.constant 0 : i32
    %c0_i32_1 = arith.constant 0 : i32
    return %c0_i32, %c0_i32_0 : i32, i32
  }
  func.func @transform_5(%arg0: i32) -> (i32, i32) {
    %c0_i32 = arith.constant 0 : i32
    %c0_i32_0 = arith.constant 0 : i32
    %c0_i32_1 = arith.constant 0 : i32
    return %c0_i32, %c0_i32_0 : i32, i32
  }
  func.func @transform_6(%arg0: i32) -> (i32, i32) {
    %c0_i32 = arith.constant 0 : i32
    %c0_i32_0 = arith.constant 0 : i32
    %c0_i32_1 = arith.constant 0 : i32
    return %c0_i32, %c0_i32_0 : i32, i32
  }
  func.func @transform_7(%arg0: i32) -> (i32, i32) {
    %c0_i32 = arith.constant 0 : i32
    %c0_i32_0 = arith.constant 0 : i32
    %c0_i32_1 = arith.constant 0 : i32
    return %c0_i32, %c0_i32_0 : i32, i32
  }
  func.func @transform_8(%arg0: i32) -> (i32, i32) {
    %c0_i32 = arith.constant 0 : i32
    %c0_i32_0 = arith.constant 0 : i32
    return %arg0, %c0_i32 : i32, i32
  }
}

</mosaic_0001>

<llo_original>
// kernel: tpu_custom_call.1
$region0: #{tpu_custom_call.1}
  #allocation0 [shape = 'u32[]', space=smem, size = 0x4, offset = 0x4, fixed_abs, tag = 'smem constant byte address 0x4 - core index']
  #allocation1 [shape = 'u32[144,128]{1,0:T(1,128)}', space=vmem, size = 0x12000, scoped, tag = 'internal scratch']
  %s0 = inlined_call_operand.vmem [shape: f32[8,32], index: 0, kind: input, shape index: {}]
  %s1 = inlined_call_operand.vmem [shape: f32[8,8], index: 1, kind: input, shape index: {}]
  %s2 = inlined_call_operand.hbm [shape: f32[32,128], index: 2, kind: input, shape index: {}]
  %s3 = inlined_call_operand.vmem [shape: f32[1,128], index: 3, kind: input, shape index: {}]
  %s4 = inlined_call_operand.vmem [shape: f32[128,128], index: 4, kind: input, shape index: {}]
  %s5 = inlined_call_operand.vmem [shape: f32[1,128], index: 5, kind: input, shape index: {}]
  %s6 = inlined_call_operand.vmem [shape: f32[128,8], index: 6, kind: input, shape index: {}]
  %s7 = inlined_call_operand.vmem [shape: f32[1,8], index: 7, kind: input, shape index: {}]
  %s8 = inlined_call_operand.hbm [shape: f32[8,8], index: 8, kind: output, shape index: {}]
  %s9 = sld [smem:[#allocation0]]
  $region46: #{tpu_custom_call.1} parent=0
    _
  %s11 = ssub.s32 1, %s9
  %s12 = scalar_select 0, %s11, %s9
  $region1: #{tpu_custom_call.1} parent=0
    #allocation2 [shape = 'u8[16384]{0}', space=vmem, size = 0x4000, scoped, tag = 'input window, operand 2, single buffered']
    #allocation3 [shape = 's32[1]{0}', space=sflag, size = 0x4, scoped, tag = 'scoped memory for tpu_custom_call.1']
    #allocation4 [shape = 's32[1]{0}', space=sflag, size = 0x4, scoped, tag = 'scoped memory for tpu_custom_call.1']
    #allocation5 [shape = 'u8[4096]{0}', space=vmem, size = 0x1000, scoped, tag = 'output window, operand 0, single buffered']
    %13 = vsyncpa [#allocation3], 0
    %14 = vsyncpa [#allocation4], 0
    // Predicated region
    $region2: #{tpu_custom_call.1} parent=1 // pred_check
      _
    $region3: #{tpu_custom_call.1} parent=1 // pred_check_branch
      %16 = sbr.rel (0) target = $region5
    $region4: #{tpu_custom_call.1} parent=1 // pred_region
      _
    $region5: #{tpu_custom_call.1} parent=1 // pred_fallthru
      _
    // Predicated region
    $region6: #{tpu_custom_call.1} parent=1 // pred_check
      _
    $region7: #{tpu_custom_call.1} parent=1 // pred_check_branch
      %18 = sbr.rel (0) target = $region9
    $region8: #{tpu_custom_call.1} parent=1 // pred_region
      _
    $region9: #{tpu_custom_call.1} parent=1 // pred_fallthru
      _
    // Predicated region
    $region10: #{tpu_custom_call.1} parent=1 // pred_check
      _
    $region11: #{tpu_custom_call.1} parent=1 // pred_check_branch
      %20 = sbr.rel (0) target = $region13
    $region12: #{tpu_custom_call.1} parent=1 // pred_region
      %s22 = ssub.s32 512, 512
      %23 = vsyncadd [#allocation3], %s22
      %s24 = sshll.u32 [#allocation2], 4
      %s25 = int_to_ptr.vmem [resolvable:$true] %s24
      %30 = dma.hbm_to_vmem [thread:$0]  %s2, 512, %s25, [#allocation3], 128, 128, 8
    $region13: #{tpu_custom_call.1} parent=1 // pred_fallthru
      _
    // Predicated region
    $region14: #{tpu_custom_call.1} parent=1 // pred_check
      _
    $region15: #{tpu_custom_call.1} parent=1 // pred_check_branch
      %32 = sbr.rel (0) target = $region17
    $region16: #{tpu_custom_call.1} parent=1 // pred_region
      _
    $region17: #{tpu_custom_call.1} parent=1 // pred_fallthru
      _
    // Predicated region
    $region18: #{tpu_custom_call.1} parent=1 // pred_check
      _
    $region19: #{tpu_custom_call.1} parent=1 // pred_check_branch
      %34 = sbr.rel (0) target = $region21
    $region20: #{tpu_custom_call.1} parent=1 // pred_region
      _
    $region21: #{tpu_custom_call.1} parent=1 // pred_fallthru
      _
    // Predicated region
    $region22: #{tpu_custom_call.1} parent=1 // pred_check
      _
    $region23: #{tpu_custom_call.1} parent=1 // pred_check_branch
      %36 = sbr.rel (0) target = $region25
    $region24: #{tpu_custom_call.1} parent=1 // pred_region
      _
    $region25: #{tpu_custom_call.1} parent=1 // pred_fallthru
      _
    // Predicated region
    $region26: #{tpu_custom_call.1} parent=1 // pred_check
      _
    $region27: #{tpu_custom_call.1} parent=1 // pred_check_branch
      %38 = sbr.rel (0) target = $region29
    $region28: #{tpu_custom_call.1} parent=1 // pred_region
      _
    $region29: #{tpu_custom_call.1} parent=1 // pred_fallthru
      _
    // Predicated region
    $region30: #{tpu_custom_call.1} parent=1 // pred_check
      _
    $region31: #{tpu_custom_call.1} parent=1 // pred_check_branch
      %40 = sbr.rel (0) target = $region33
    $region32: #{tpu_custom_call.1} parent=1 // pred_region
      _
    $region33: #{tpu_custom_call.1} parent=1 // pred_fallthru
      _
    // Predicated region
    $region34: #{tpu_custom_call.1} parent=1 // pred_check
      _
    $region35: #{tpu_custom_call.1} parent=1 // pred_check_branch
      %42 = sbr.rel (0) target = $region37
    $region36: #{tpu_custom_call.1} parent=1 // pred_region
      %43 = dma.done [#allocation3], 512
    $region37: #{tpu_custom_call.1} parent=1 // pred_fallthru
      _
    %v44 = vld [vmem:[%s0] sm:$0xff]
    %v45 = vld [vmem:[#allocation2] sm:$0xff]
    %v46 = vld [vmem:[#allocation2 + $0x8] sm:$0xff]
    %v47 = vld [vmem:[#allocation2 + $0x10] sm:$0xff]
    %v48 = vld [vmem:[#allocation2 + $0x18] sm:$0xff]
    %v49 = vld [vmem:[%s3] sm:$0x1]
    %v51 = vlaneseq
    %v52 = vshrl.u32 %v51, 7
    %v53 = vsub.s32 0, %v52
    %v54 = vrot.slane %v49, %v53
    %vm56 = vcmask 261120
    %v58 = vsel %vm56, %v44, 0
    %60 = vmatprep.subr.mxu0 0.0
    %61 = vmatpush1.msra.mxu0 %v45
    %62 = vmatprep.subr.mxu0 0.0
    %63 = vmatpush1.msra.mxu0 %v46
    %64 = vmatprep.subr.mxu0 0.0
    %65 = vmatpush1.msra.mxu0 %v47
    %66 = vmatprep.subr.mxu0 0.0
    %67 = vmatpush1.msra.mxu0 %v48
    %68 = vmatprep.subr.mxu0 0.0
    %69 = vmatpush1.msra.mxu0 0.0
    %70 = vmatprep.subr.mxu0 0.0
    %71 = vmatpush1.msra.mxu0 0.0
    %72 = vmatprep.subr.mxu0 0.0
    %73 = vmatpush1.msra.mxu0 0.0
    %74 = vmatprep.subr.mxu0 0.0
    %75 = vmatpush1.msra.mxu0 0.0
    %76 = vmatprep.subr.mxu0 0.0
    %77 = vmatpush1.msra.mxu0 0.0
    %78 = vmatprep.subr.mxu0 0.0
    %79 = vmatpush1.msra.mxu0 0.0
    %80 = vmatprep.subr.mxu0 0.0
    %81 = vmatpush1.msra.mxu0 0.0
    %82 = vmatprep.subr.mxu0 0.0
    %83 = vmatpush1.msra.mxu0 0.0
    %84 = vmatprep.subr.mxu0 0.0
    %85 = vmatpush1.msra.mxu0 0.0
    %86 = vmatprep.subr.mxu0 0.0
    %87 = vmatpush1.msra.mxu0 0.0
    %88 = vmatprep.subr.mxu0 0.0
    %89 = vmatpush1.msra.mxu0 0.0
    %90 = vmatprep.subr.mxu0 0.0
    %91 = vmatpush1.msra.mxu0 0.0
    %92 = vmatprep.subr.mxu0 0.0
    %93 = vmatpush1.msra.mxu0 0.0
    %94 = vmatprep.subr.mxu0 0.0
    %95 = vmatpush1.msra.mxu0 0.0
    %96 = vmatprep.subr.mxu0 0.0
    %97 = vmatpush1.msra.mxu0 0.0
    %98 = vmatprep.subr.mxu0 0.0
    %99 = vmatpush1.msra.mxu0 0.0
    %100 = vmatprep.subr.mxu0 0.0
    %101 = vmatpush1.msra.mxu0 0.0
    %102 = vmatprep.subr.mxu0 0.0
    %103 = vmatpush1.msra.mxu0 0.0
    %104 = vmatprep.subr.mxu0 0.0
    %105 = vmatpush1.msra.mxu0 0.0
    %106 = vmatprep.subr.mxu0 0.0
    %107 = vmatpush1.msra.mxu0 0.0
    %108 = vmatprep.subr.mxu0 0.0
    %109 = vmatpush1.msra.mxu0 0.0
    %110 = vmatprep.subr.mxu0 0.0
    %111 = vmatpush1.msra.mxu0 0.0
    %112 = vmatprep.subr.mxu0 0.0
    %113 = vmatpush1.msra.mxu0 0.0
    %114 = vmatprep.subr.mxu0 0.0
    %115 = vmatpush1.msra.mxu0 0.0
    %116 = vmatprep.subr.mxu0 0.0
    %117 = vmatpush1.msra.mxu0 0.0
    %118 = vmatprep.subr.mxu0 0.0
    %119 = vmatpush1.msra.mxu0 0.0
    %120 = vmatprep.subr.mxu0 0.0
    %121 = vmatpush1.msra.mxu0 0.0
    %122 = vmatprep.subr.mxu0 0.0
    %123 = vmatpush1.msra.mxu0 0.0
    %124 = vmatprep.mubr.f32.mxu0 0.0
    %125 = vmatmul.mubr.f32.gmra.mrb[0].mxu0 %v58
    %v126 = vpop.f32.mrb[0].mxu0
    %v127 = vadd.f32 %v54, %v126
    %v128 = vpop.f32.mrb[0].mxu0
    %129 = vdwg.mxu0
    %v130 = vmax.f32 %v127, 0.0
    %v131 = vld [vmem:[%s4] sm:$0xff]
    %v132 = vld [vmem:[%s4 + $0x8] sm:$0xff]
    %v133 = vld [vmem:[%s4 + $0x10] sm:$0xff]
    %v134 = vld [vmem:[%s4 + $0x18] sm:$0xff]
    %v135 = vld [vmem:[%s4 + $0x20] sm:$0xff]
    %v136 = vld [vmem:[%s4 + $0x28] sm:$0xff]
    %v137 = vld [vmem:[%s4 + $0x30] sm:$0xff]
    %v138 = vld [vmem:[%s4 + $0x38] sm:$0xff]
    %v139 = vld [vmem:[%s4 + $0x40] sm:$0xff]
    %v140 = vld [vmem:[%s4 + $0x48] sm:$0xff]
    %v141 = vld [vmem:[%s4 + $0x50] sm:$0xff]
    %v142 = vld [vmem:[%s4 + $0x58] sm:$0xff]
    %v143 = vld [vmem:[%s4 + $0x60] sm:$0xff]
    %v144 = vld [vmem:[%s4 + $0x68] sm:$0xff]
    %v145 = vld [vmem:[%s4 + $0x70] sm:$0xff]
    %v146 = vld [vmem:[%s4 + $0x78] sm:$0xff]
    %v147 = vld [vmem:[%s5] sm:$0x1]
    %v149 = vlaneseq
    %v150 = vshrl.u32 %v149, 7
    %v151 = vsub.s32 0, %v150
    %v152 = vrot.slane %v147, %v151
    %154 = vmatprep.subr.mxu0 0.0
    %155 = vmatpush1.msra.mxu0 %v131
    %156 = vmatprep.subr.mxu0 0.0
    %157 = vmatpush1.msra.mxu0 %v132
    %158 = vmatprep.subr.mxu0 0.0
    %159 = vmatpush1.msra.mxu0 %v133
    %160 = vmatprep.subr.mxu0 0.0
    %161 = vmatpush1.msra.mxu0 %v134
    %162 = vmatprep.subr.mxu0 0.0
    %163 = vmatpush1.msra.mxu0 %v135
    %164 = vmatprep.subr.mxu0 0.0
    %165 = vmatpush1.msra.mxu0 %v136
    %166 = vmatprep.subr.mxu0 0.0
    %167 = vmatpush1.msra.mxu0 %v137
    %168 = vmatprep.subr.mxu0 0.0
    %169 = vmatpush1.msra.mxu0 %v138
    %170 = vmatprep.subr.mxu0 0.0
    %171 = vmatpush1.msra.mxu0 %v139
    %172 = vmatprep.subr.mxu0 0.0
    %173 = vmatpush1.msra.mxu0 %v140
    %174 = vmatprep.subr.mxu0 0.0
    %175 = vmatpush1.msra.mxu0 %v141
    %176 = vmatprep.subr.mxu0 0.0
    %177 = vmatpush1.msra.mxu0 %v142
    %178 = vmatprep.subr.mxu0 0.0
    %179 = vmatpush1.msra.mxu0 %v143
    %180 = vmatprep.subr.mxu0 0.0
    %181 = vmatpush1.msra.mxu0 %v144
    %182 = vmatprep.subr.mxu0 0.0
    %183 = vmatpush1.msra.mxu0 %v145
    %184 = vmatprep.subr.mxu0 0.0
    %185 = vmatpush1.msra.mxu0 %v146
    %186 = vmatprep.subr.mxu0 0.0
    %187 = vmatpush1.msra.mxu0 0.0
    %188 = vmatprep.subr.mxu0 0.0
    %189 = vmatpush1.msra.mxu0 0.0
    %190 = vmatprep.subr.mxu0 0.0
    %191 = vmatpush1.msra.mxu0 0.0
    %192 = vmatprep.subr.mxu0 0.0
    %193 = vmatpush1.msra.mxu0 0.0
    %194 = vmatprep.subr.mxu0 0.0
    %195 = vmatpush1.msra.mxu0 0.0
    %196 = vmatprep.subr.mxu0 0.0
    %197 = vmatpush1.msra.mxu0 0.0
    %198 = vmatprep.subr.mxu0 0.0
    %199 = vmatpush1.msra.mxu0 0.0
    %200 = vmatprep.subr.mxu0 0.0
    %201 = vmatpush1.msra.mxu0 0.0
    %202 = vmatprep.subr.mxu0 0.0
    %203 = vmatpush1.msra.mxu0 0.0
    %204 = vmatprep.subr.mxu0 0.0
    %205 = vmatpush1.msra.mxu0 0.0
    %206 = vmatprep.subr.mxu0 0.0
    %207 = vmatpush1.msra.mxu0 0.0
    %208 = vmatprep.subr.mxu0 0.0
    %209 = vmatpush1.msra.mxu0 0.0
    %210 = vmatprep.subr.mxu0 0.0
    %211 = vmatpush1.msra.mxu0 0.0
    %212 = vmatprep.subr.mxu0 0.0
    %213 = vmatpush1.msra.mxu0 0.0
    %214 = vmatprep.subr.mxu0 0.0
    %215 = vmatpush1.msra.mxu0 0.0
    %216 = vmatprep.subr.mxu0 0.0
    %217 = vmatpush1.msra.mxu0 0.0
    %218 = vmatprep.mubr.f32.mxu0 0.0
    %219 = vmatmul.mubr.f32.gmra.mrb[0].mxu0 %v130
    %v220 = vpop.f32.mrb[0].mxu0
    %v221 = vadd.f32 %v152, %v220
    %v222 = vpop.f32.mrb[0].mxu0
    %223 = vdwg.mxu0
    %v224 = vmax.f32 %v221, 0.0
    %v225 = vld [vmem:[%s6] sm:$0xff]
    %v226 = vld [vmem:[%s6 + $0x8] sm:$0xff]
    %v227 = vld [vmem:[%s6 + $0x10] sm:$0xff]
    %v228 = vld [vmem:[%s6 + $0x18] sm:$0xff]
    %v229 = vld [vmem:[%s6 + $0x20] sm:$0xff]
    %v230 = vld [vmem:[%s6 + $0x28] sm:$0xff]
    %v231 = vld [vmem:[%s6 + $0x30] sm:$0xff]
    %v232 = vld [vmem:[%s6 + $0x38] sm:$0xff]
    %v233 = vld [vmem:[%s6 + $0x40] sm:$0xff]
    %v234 = vld [vmem:[%s6 + $0x48] sm:$0xff]
    %v235 = vld [vmem:[%s6 + $0x50] sm:$0xff]
    %v236 = vld [vmem:[%s6 + $0x58] sm:$0xff]
    %v237 = vld [vmem:[%s6 + $0x60] sm:$0xff]
    %v238 = vld [vmem:[%s6 + $0x68] sm:$0xff]
    %v239 = vld [vmem:[%s6 + $0x70] sm:$0xff]
    %v240 = vld [vmem:[%s6 + $0x78] sm:$0xff]
    %v241 = vld [vmem:[%s7] sm:$0x1]
    %v243 = vlaneseq
    %v244 = vshrl.u32 %v243, 7
    %v245 = vsub.s32 0, %v244
    %v246 = vrot.slane %v241, %v245
    %248 = vmatprep.subr.mxu0 0.0
    %249 = vmatpush1.msra.mxu0 %v225
    %250 = vmatprep.subr.mxu0 0.0
    %251 = vmatpush1.msra.mxu0 %v226
    %252 = vmatprep.subr.mxu0 0.0
    %253 = vmatpush1.msra.mxu0 %v227
    %254 = vmatprep.subr.mxu0 0.0
    %255 = vmatpush1.msra.mxu0 %v228
    %256 = vmatprep.subr.mxu0 0.0
    %257 = vmatpush1.msra.mxu0 %v229
    %258 = vmatprep.subr.mxu0 0.0
    %259 = vmatpush1.msra.mxu0 %v230
    %260 = vmatprep.subr.mxu0 0.0
    %261 = vmatpush1.msra.mxu0 %v231
    %262 = vmatprep.subr.mxu0 0.0
    %263 = vmatpush1.msra.mxu0 %v232
    %264 = vmatprep.subr.mxu0 0.0
    %265 = vmatpush1.msra.mxu0 %v233
    %266 = vmatprep.subr.mxu0 0.0
    %267 = vmatpush1.msra.mxu0 %v234
    %268 = vmatprep.subr.mxu0 0.0
    %269 = vmatpush1.msra.mxu0 %v235
    %270 = vmatprep.subr.mxu0 0.0
    %271 = vmatpush1.msra.mxu0 %v236
    %272 = vmatprep.subr.mxu0 0.0
    %273 = vmatpush1.msra.mxu0 %v237
    %274 = vmatprep.subr.mxu0 0.0
    %275 = vmatpush1.msra.mxu0 %v238
    %276 = vmatprep.subr.mxu0 0.0
    %277 = vmatpush1.msra.mxu0 %v239
    %278 = vmatprep.subr.mxu0 0.0
    %279 = vmatpush1.msra.mxu0 %v240
    %280 = vmatprep.subr.mxu0 0.0
    %281 = vmatpush1.msra.mxu0 0.0
    %282 = vmatprep.subr.mxu0 0.0
    %283 = vmatpush1.msra.mxu0 0.0
    %284 = vmatprep.subr.mxu0 0.0
    %285 = vmatpush1.msra.mxu0 0.0
    %286 = vmatprep.subr.mxu0 0.0
    %287 = vmatpush1.msra.mxu0 0.0
    %288 = vmatprep.subr.mxu0 0.0
    %289 = vmatpush1.msra.mxu0 0.0
    %290 = vmatprep.subr.mxu0 0.0
    %291 = vmatpush1.msra.mxu0 0.0
    %292 = vmatprep.subr.mxu0 0.0
    %293 = vmatpush1.msra.mxu0 0.0
    %294 = vmatprep.subr.mxu0 0.0
    %295 = vmatpush1.msra.mxu0 0.0
    %296 = vmatprep.subr.mxu0 0.0
    %297 = vmatpush1.msra.mxu0 0.0
    %298 = vmatprep.subr.mxu0 0.0
    %299 = vmatpush1.msra.mxu0 0.0
    %300 = vmatprep.subr.mxu0 0.0
    %301 = vmatpush1.msra.mxu0 0.0
    %302 = vmatprep.subr.mxu0 0.0
    %303 = vmatpush1.msra.mxu0 0.0
    %304 = vmatprep.subr.mxu0 0.0
    %305 = vmatpush1.msra.mxu0 0.0
    %306 = vmatprep.subr.mxu0 0.0
    %307 = vmatpush1.msra.mxu0 0.0
    %308 = vmatprep.subr.mxu0 0.0
    %309 = vmatpush1.msra.mxu0 0.0
    %310 = vmatprep.subr.mxu0 0.0
    %311 = vmatpush1.msra.mxu0 0.0
    %312 = vmatprep.mubr.f32.mxu0 0.0
    %313 = vmatmul.mubr.f32.gmra.mrb[0].mxu0 %v224
    %v314 = vpop.f32.mrb[0].mxu0
    %v315 = vadd.f32 %v246, %v314
    %v316 = vpop.f32.mrb[0].mxu0
    %317 = vdwg.mxu0
    %v318 = vmax.f32 %v315, 0.0
    %v319 = vand.u32 2147483647, %v315
    %v320 = vsub.f32 0.0, %v319
    %v321 = vmul.f32 %v320, 1.442695
    %v322 = vpow.pop %v321
    %v323 = vadd.f32 %v322, 1.0
    %v324 = vlog2.pop %v323
    %v325 = vmul.f32 %v324, 0.6931472
    %v326 = vmul.f32 -0.5, %v322
    %v327 = vadd.f32 %v326, 1.0
    %v328 = vmul.f32 %v327, %v322
    %v329 = vand.u32 2147483647, %v322
    %vm330 = vcmp.lt.f32.partialorder %v329, 0.0004427343
    %v331 = vsel %vm330, %v328, %v325
    %v332 = vadd.f32 %v318, %v331
    %v333 = vld [vmem:[%s1] sm:$0xff]
    %v334 = vmul.f32 %v333, 0.5
    %v335 = vadd.f32 %v332, %v334
    %vm336 = vcmask 64512
    %337 = vst.msk [vmem:[#allocation5] sm:$0xff] %vm336, %v335
    // Predicated region
    $region38: #{tpu_custom_call.1} parent=1 // pred_check
      _
    $region39: #{tpu_custom_call.1} parent=1 // pred_check_branch
      %339 = sbr.rel (0) target = $region41
    $region40: #{tpu_custom_call.1} parent=1 // pred_region
      %s341 = ssub.s32 128, 128
      %342 = vsyncadd [#allocation4], %s341
      %s344 = sshll.u32 [#allocation5], 4
      %s345 = int_to_ptr.vmem [resolvable:$true] %s344
      %347 = dma.vmem_to_hbm [thread:$0]  %s345, 128, %s8, [#allocation4]
    $region41: #{tpu_custom_call.1} parent=1 // pred_fallthru
      _
    // Predicated region
    $region42: #{tpu_custom_call.1} parent=1 // pred_check
      _
    $region43: #{tpu_custom_call.1} parent=1 // pred_check_branch
      %349 = sbr.rel (0) target = $region45
    $region44: #{tpu_custom_call.1} parent=1 // pred_region
      %350 = dma.done [#allocation4], 128
    $region45: #{tpu_custom_call.1} parent=1 // pred_fallthru
      _
    %351 = vsyncpa [#allocation3], 1
    %352 = vsyncpa [#allocation4], 1

</llo_original>
